<compile_context>
chip_gen: v7x
topology: tpu7x:2x2x1
jax: 0.10.0
libtpu: 0.0.40
codegen_flags: <defaults>
</compile_context>

<pallas_src>
import functools

import jax
import jax.numpy as jnp
from jax.experimental import pallas as pl
from jax.experimental.pallas import tpu as pltpu


def _round_up(x, m):
    return ((x + m - 1) // m) * m


def _ffn_kernel(x_ref, w1_ref, b1_ref, w2_ref, b2_ref, o_ref, acc_ref, *,
                activation):
    # Grid axes: (i = M tile, j = hidden tile).  The hidden axis is a reduction
    # for the second matmul, so the output block is resident across it.
    j = pl.program_id(1)

    @pl.when(j == 0)
    def _():
        acc_ref[...] = jnp.zeros_like(acc_ref)

    # linear1 (slice of the hidden dim): (TM, Din) @ (Din, TH) -> f32 (TM, TH)
    h = jnp.dot(x_ref[...], w1_ref[...], preferred_element_type=jnp.float32)
    h = h + b1_ref[...]                      # broadcast (1, TH) over rows
    if activation == "relu":
        h = jnp.maximum(h, 0.0)
    elif activation == "gelu":
        h = jax.nn.gelu(h, approximate=False)
    else:
        raise ValueError(f"activation should be relu/gelu, not {activation}")

    # linear2 partial sum: (TM, TH) @ (TH, Dout) accumulated in f32.
    acc_ref[...] += jnp.dot(h.astype(w2_ref.dtype), w2_ref[...],
                            preferred_element_type=jnp.float32)

    @pl.when(j == pl.num_programs(1) - 1)
    def _():
        o_ref[...] = (acc_ref[...] + b2_ref[...]).astype(o_ref.dtype)


@functools.partial(jax.jit, static_argnames=("activation", "tile_m", "tile_h"))
def output_ffn(x, w1, b1, w2, b2, *, activation="relu", tile_m=256, tile_h=512):
    """Fused OutputFFN forward.

    x:  (..., dim_in)
    w1: (dim_hid, dim_in), b1: (dim_hid,)      [PyTorch nn.Linear layout]
    w2: (dim_out, dim_hid), b2: (dim_out,)
    returns: (..., dim_out)
    """
    orig_shape = x.shape
    dim_in = orig_shape[-1]
    dim_hid = w1.shape[0]
    dim_out = w2.shape[0]

    x2d = x.reshape(-1, dim_in)
    m = x2d.shape[0]

    # ---- tile sizes (adapt down for tiny inputs, keep multiples of 8 / 128) ----
    tile_m_eff = max(8, _round_up(min(tile_m, _round_up(m, 8)), 8))
    m_pad = _round_up(m, tile_m_eff)

    din_p = _round_up(dim_in, 128)
    dout_p = _round_up(dim_out, 128)
    if dim_hid <= tile_h:
        tile_h_eff = _round_up(dim_hid, 128)
        dhid_p = tile_h_eff
    else:
        tile_h_eff = _round_up(tile_h, 128)
        dhid_p = _round_up(dim_hid, tile_h_eff)

    # ---- pad + pre-transpose weights (lane-dense layout, no in-kernel .T) ----
    if (m_pad, din_p) != (m, dim_in):
        x2d = jnp.pad(x2d, ((0, m_pad - m), (0, din_p - dim_in)))
    w1t = jnp.pad(w1.T, ((0, din_p - dim_in), (0, dhid_p - dim_hid)))
    w2t = jnp.pad(w2.T, ((0, dhid_p - dim_hid), (0, dout_p - dim_out)))
    b1p = jnp.pad(b1.reshape(1, dim_hid), ((0, 0), (0, dhid_p - dim_hid)))
    b2p = jnp.pad(b2.reshape(1, dim_out), ((0, 0), (0, dout_p - dim_out)))

    grid = (m_pad // tile_m_eff, dhid_p // tile_h_eff)

    # ---- explicit VMEM budget: double-buffered IO + weight tiles + accumulator ----
    in_isz = jnp.dtype(x.dtype).itemsize
    w_isz = jnp.dtype(w1.dtype).itemsize
    vmem_bytes = (
        2 * tile_m_eff * din_p * in_isz                                # x tiles
        + 2 * tile_m_eff * dout_p * in_isz                             # out tiles
        + 2 * (din_p * tile_h_eff + tile_h_eff * dout_p) * w_isz       # W1/W2 tiles
        + 2 * (tile_h_eff + dout_p) * w_isz                            # bias tiles
        + tile_m_eff * dout_p * 4                                      # f32 acc scratch
        + tile_m_eff * tile_h_eff * 4                                  # f32 hidden
    )
    vmem_limit = min(max(int(1.25 * vmem_bytes) + (4 << 20), 32 << 20), 120 << 20)

    kernel = functools.partial(_ffn_kernel, activation=activation)

    out2d = pl.pallas_call(
        kernel,
        out_shape=jax.ShapeDtypeStruct((m_pad, dout_p), x.dtype),
        grid_spec=pltpu.PrefetchScalarGridSpec(
            num_scalar_prefetch=0,
            grid=grid,
            in_specs=[
                pl.BlockSpec((tile_m_eff, din_p), lambda i, j: (i, 0)),   # x
                pl.BlockSpec((din_p, tile_h_eff), lambda i, j: (0, j)),   # W1^T slice
                pl.BlockSpec((1, tile_h_eff), lambda i, j: (0, j)),       # b1 slice
                pl.BlockSpec((tile_h_eff, dout_p), lambda i, j: (j, 0)),  # W2^T slice
                pl.BlockSpec((1, dout_p), lambda i, j: (0, 0)),           # b2
            ],
            out_specs=pl.BlockSpec((tile_m_eff, dout_p), lambda i, j: (i, 0)),
            scratch_shapes=[pltpu.VMEM((tile_m_eff, dout_p), jnp.float32)],
        ),
        compiler_params=pltpu.CompilerParams(
            dimension_semantics=("parallel", "arbitrary"),
            vmem_limit_bytes=vmem_limit,
        ),
    )(x2d, w1t, b1p, w2t, b2p)

    out2d = out2d[:m, :dim_out]
    return out2d.reshape(*orig_shape[:-1], dim_out)


def _ref_ffn(x, w1, b1, w2, b2):
    h = jnp.maximum(x @ w1.T + b1, 0.0)
    return h @ w2.T + b2


if __name__ == "__main__":
    key = jax.random.PRNGKey(0)
    batch, seq, dim_in, dim_out = 2, 8, 32, 32

    k_x, k_w1, k_b1, k_w2, k_b2 = jax.random.split(key, 5)
    x = jax.random.normal(k_x, (batch, seq, dim_in), dtype=jnp.float32)
    # Deterministic init mimicking nn.Linear's uniform(-1/sqrt(fan_in), +...)
    lim1 = 1.0 / (dim_in ** 0.5)
    lim2 = 1.0 / (dim_out ** 0.5)
    w1 = jax.random.uniform(k_w1, (dim_out, dim_in), jnp.float32, -lim1, lim1)
    b1 = jax.random.uniform(k_b1, (dim_out,), jnp.float32, -lim1, lim1)
    w2 = jax.random.uniform(k_w2, (dim_out, dim_out), jnp.float32, -lim2, lim2)
    b2 = jax.random.uniform(k_b2, (dim_out,), jnp.float32, -lim2, lim2)

    out = output_ffn(x, w1, b1, w2, b2)
    out = jax.block_until_ready(out)

    ref = _ref_ffn(x, w1, b1, w2, b2)
    assert out.shape == (batch, seq, dim_out), out.shape
    assert jnp.allclose(out, ref, atol=1e-5, rtol=1e-5), "mismatch vs reference"

    print("KERNEL_OK")
</pallas_src>

<mosaic_0001>
module attributes {stable_mosaic.version = 11 : i64} {
  func.func @_ffn_kernel(%arg0: i32, %arg1: i32, %arg2: memref<16x128xf32, #tpu.memory_space<vmem>>, %arg3: memref<128x128xf32, #tpu.memory_space<vmem>>, %arg4: memref<1x128xf32, #tpu.memory_space<vmem>>, %arg5: memref<128x128xf32, #tpu.memory_space<vmem>>, %arg6: memref<1x128xf32, #tpu.memory_space<vmem>>, %arg7: memref<16x128xf32, #tpu.memory_space<vmem>>, %arg8: memref<16x128xf32, #tpu.memory_space<vmem>>) attributes {dimension_semantics = [#tpu.dimension_semantics<parallel>, #tpu.dimension_semantics<arbitrary>], iteration_bounds = array<i64: 1, 1>, scalar_prefetch = 0 : i64, scratch_operands = 1 : i64, tpu.core_type = #tpu.core_type<tc>, window_params = [{transform_indices = @transform_0, window_bounds = array<i64: 16, 128>}, {transform_indices = @transform_1, window_bounds = array<i64: 128, 128>}, {transform_indices = @transform_2, window_bounds = array<i64: 1, 128>}, {transform_indices = @transform_3, window_bounds = array<i64: 128, 128>}, {pipeline_mode = #tpu.pipeline_mode<synchronous>, transform_indices = @transform_4, window_bounds = array<i64: 1, 128>}, {transform_indices = @transform_5, window_bounds = array<i64: 16, 128>}]} {
    %c0_i32 = arith.constant 0 : i32
    %0 = arith.cmpi eq, %arg1, %c0_i32 : i32
    %1 = arith.extui %0 : i1 to i32
    %c0_i32_0 = arith.constant 0 : i32
    %2 = arith.cmpi ne, %1, %c0_i32_0 : i32
    scf.if %2 {
      %cst_16 = arith.constant 0.000000e+00 : f32
      %19 = vector.broadcast %cst_16 : f32 to vector<16x128xf32>
      %c0_17 = arith.constant 0 : index
      %c0_18 = arith.constant 0 : index
      %20 = vector.load %arg8[%c0_17, %c0_18] : memref<16x128xf32, #tpu.memory_space<vmem>>, vector<16x128xf32>
      tpu.vector_store %arg8[%c0_17, %c0_18], %19 {strides = array<i32>} : memref<16x128xf32, #tpu.memory_space<vmem>>, vector<16x128xf32>,
    } else {
    }
    %c0 = arith.constant 0 : index
    %c0_1 = arith.constant 0 : index
    %3 = vector.load %arg2[%c0, %c0_1] : memref<16x128xf32, #tpu.memory_space<vmem>>, vector<16x128xf32>
    %c0_2 = arith.constant 0 : index
    %c0_3 = arith.constant 0 : index
    %4 = vector.load %arg3[%c0_2, %c0_3] : memref<128x128xf32, #tpu.memory_space<vmem>>, vector<128x128xf32>
    %cst = arith.constant dense<0.000000e+00> : vector<16x128xf32>
    %5 = tpu.matmul %3, %4, %cst {dimension_numbers = #tpu.dot_dimension_numbers<[1], [0], [0], [1], [0, 0, 1, 1], [], []>} : vector<16x128xf32>, vector<128x128xf32>, vector<16x128xf32> -> vector<16x128xf32>
    %c0_4 = arith.constant 0 : index
    %c0_5 = arith.constant 0 : index
    %6 = vector.load %arg4[%c0_4, %c0_5] : memref<1x128xf32, #tpu.memory_space<vmem>>, vector<1x128xf32>
    %7 = vector.broadcast %6 : vector<1x128xf32> to vector<16x128xf32>
    %8 = arith.addf %5, %7 : vector<16x128xf32>
    %cst_6 = arith.constant 0.000000e+00 : f32
    %9 = vector.broadcast %cst_6 : f32 to vector<16x128xf32>
    %10 = arith.maximumf %8, %9 : vector<16x128xf32>
    %c0_7 = arith.constant 0 : index
    %c0_8 = arith.constant 0 : index
    %11 = vector.load %arg8[%c0_7, %c0_8] : memref<16x128xf32, #tpu.memory_space<vmem>>, vector<16x128xf32>
    %c0_9 = arith.constant 0 : index
    %c0_10 = arith.constant 0 : index
    %12 = vector.load %arg5[%c0_9, %c0_10] : memref<128x128xf32, #tpu.memory_space<vmem>>, vector<128x128xf32>
    %cst_11 = arith.constant dense<0.000000e+00> : vector<16x128xf32>
    %13 = tpu.matmul %10, %12, %cst_11 {dimension_numbers = #tpu.dot_dimension_numbers<[1], [0], [0], [1], [0, 0, 1, 1], [], []>} : vector<16x128xf32>, vector<128x128xf32>, vector<16x128xf32> -> vector<16x128xf32>
    %14 = arith.addf %11, %13 : vector<16x128xf32>
    %c0_12 = arith.constant 0 : index
    %c0_13 = arith.constant 0 : index
    %15 = vector.load %arg8[%c0_12, %c0_13] : memref<16x128xf32, #tpu.memory_space<vmem>>, vector<16x128xf32>
    tpu.vector_store %arg8[%c0_12, %c0_13], %14 {strides = array<i32>} : memref<16x128xf32, #tpu.memory_space<vmem>>, vector<16x128xf32>,
    %c0_i32_14 = arith.constant 0 : i32
    %16 = arith.cmpi eq, %arg1, %c0_i32_14 : i32
    %17 = arith.extui %16 : i1 to i32
    %c0_i32_15 = arith.constant 0 : i32
    %18 = arith.cmpi ne, %17, %c0_i32_15 : i32
    scf.if %18 {
      %c0_16 = arith.constant 0 : index
      %c0_17 = arith.constant 0 : index
      %19 = vector.load %arg8[%c0_16, %c0_17] : memref<16x128xf32, #tpu.memory_space<vmem>>, vector<16x128xf32>
      %c0_18 = arith.constant 0 : index
      %c0_19 = arith.constant 0 : index
      %20 = vector.load %arg6[%c0_18, %c0_19] : memref<1x128xf32, #tpu.memory_space<vmem>>, vector<1x128xf32>
      %21 = vector.broadcast %20 : vector<1x128xf32> to vector<16x128xf32>
      %22 = arith.addf %19, %21 : vector<16x128xf32>
      %c0_20 = arith.constant 0 : index
      %c0_21 = arith.constant 0 : index
      %23 = vector.load %arg7[%c0_20, %c0_21] : memref<16x128xf32, #tpu.memory_space<vmem>>, vector<16x128xf32>
      tpu.vector_store %arg7[%c0_20, %c0_21], %22 {strides = array<i32>} : memref<16x128xf32, #tpu.memory_space<vmem>>, vector<16x128xf32>,
    } else {
    }
    return
  }
  func.func @transform_0(%arg0: i32, %arg1: i32) -> (i32, i32) {
    %c0_i32 = arith.constant 0 : i32
    %c0_i32_0 = arith.constant 0 : i32
    return %arg0, %c0_i32 : i32, i32
  }
  func.func @transform_1(%arg0: i32, %arg1: i32) -> (i32, i32) {
    %c0_i32 = arith.constant 0 : i32
    %c0_i32_0 = arith.constant 0 : i32
    return %c0_i32, %arg1 : i32, i32
  }
  func.func @transform_2(%arg0: i32, %arg1: i32) -> (i32, i32) {
    %c0_i32 = arith.constant 0 : i32
    %c0_i32_0 = arith.constant 0 : i32
    return %c0_i32, %arg1 : i32, i32
  }
  func.func @transform_3(%arg0: i32, %arg1: i32) -> (i32, i32) {
    %c0_i32 = arith.constant 0 : i32
    %c0_i32_0 = arith.constant 0 : i32
    return %arg1, %c0_i32 : i32, i32
  }
  func.func @transform_4(%arg0: i32, %arg1: i32) -> (i32, i32) {
    %c0_i32 = arith.constant 0 : i32
    %c0_i32_0 = arith.constant 0 : i32
    %c0_i32_1 = arith.constant 0 : i32
    return %c0_i32, %c0_i32_0 : i32, i32
  }
  func.func @transform_5(%arg0: i32, %arg1: i32) -> (i32, i32) {
    %c0_i32 = arith.constant 0 : i32
    %c0_i32_0 = arith.constant 0 : i32
    return %arg0, %c0_i32 : i32, i32
  }
}

</mosaic_0001>

<llo_original>
// kernel: output_ffn.1
$region0: #{output_ffn.1}
  #allocation0 [shape = 'u32[]', space=smem, size = 0x4, offset = 0x4, fixed_abs, tag = 'smem constant byte address 0x4 - core index']
  #allocation1 [shape = 'u32[144,128]{1,0:T(1,128)}', space=vmem, size = 0x12000, scoped, tag = 'internal scratch']
  #allocation2 [shape = 'f32[16,128]{1,0:T(8,128)}', space=vmem, size = 0x2000, scoped, tag = 'scratch operand']
  %s0 = inlined_call_operand.vmem [shape: f32[16,128], index: 0, kind: input, shape index: {}]
  %s1 = inlined_call_operand.vmem [shape: f32[128,128], index: 1, kind: input, shape index: {}]
  %s2 = inlined_call_operand.vmem [shape: f32[1,128], index: 2, kind: input, shape index: {}]
  %s3 = inlined_call_operand.vmem [shape: f32[128,128], index: 3, kind: input, shape index: {}]
  %s4 = inlined_call_operand.vmem [shape: f32[1,128], index: 4, kind: input, shape index: {}]
  %s5 = inlined_call_operand.vmem [shape: f32[16,128], index: 5, kind: output, shape index: {}]
  %s6 = sld [smem:[#allocation0]]
  $region38: #{output_ffn.1} parent=0
    _
  %s8 = ssub.s32 1, %s6
  %s9 = scalar_select 0, %s8, %s6
  // Predicated region
  $region2: #{output_ffn.1} parent=0 // pred_check
    _
  $region3: #{output_ffn.1} parent=0 // pred_check_branch
    %11 = sbr.rel (0) target = $region5
  $region4: #{output_ffn.1} parent=0 // pred_region
    _
  $region5: #{output_ffn.1} parent=0 // pred_fallthru
    _
  // Predicated region
  $region6: #{output_ffn.1} parent=0 // pred_check
    _
  $region7: #{output_ffn.1} parent=0 // pred_check_branch
    %13 = sbr.rel (0) target = $region9
  $region8: #{output_ffn.1} parent=0 // pred_region
    _
  $region9: #{output_ffn.1} parent=0 // pred_fallthru
    _
  // Predicated region
  $region10: #{output_ffn.1} parent=0 // pred_check
    _
  $region11: #{output_ffn.1} parent=0 // pred_check_branch
    %15 = sbr.rel (0) target = $region13
  $region12: #{output_ffn.1} parent=0 // pred_region
    _
  $region13: #{output_ffn.1} parent=0 // pred_fallthru
    _
  // Predicated region
  $region14: #{output_ffn.1} parent=0 // pred_check
    _
  $region15: #{output_ffn.1} parent=0 // pred_check_branch
    %17 = sbr.rel (0) target = $region17
  $region16: #{output_ffn.1} parent=0 // pred_region
    _
  $region17: #{output_ffn.1} parent=0 // pred_fallthru
    _
  // Predicated region
  $region18: #{output_ffn.1} parent=0 // pred_check
    _
  $region19: #{output_ffn.1} parent=0 // pred_check_branch
    %19 = sbr.rel (0) target = $region21
  $region20: #{output_ffn.1} parent=0 // pred_region
    _
  $region21: #{output_ffn.1} parent=0 // pred_fallthru
    _
  %p20 = scmp.eq.s32.totalorder 0, 0
  // Predicated region
  $region22: #{output_ffn.1} parent=0 // pred_check
    %p21 = pneg %p20
  $region23: #{output_ffn.1} parent=0 // pred_check_branch
    %23 = sbr.rel (%p21) target = $region25
  $region24: #{output_ffn.1} parent=0 // pred_region
    %24 = vst [vmem:[#allocation2] sm:$0xff] 0.0
    %25 = vst [vmem:[#allocation2 + $0x8] sm:$0xff] 0.0
  $region25: #{output_ffn.1} parent=0 // pred_fallthru
    _
  %v26 = vld [vmem:[%s0] sm:$0xff]
  %v27 = vld [vmem:[%s0 + $0x8] sm:$0xff]
  %v28 = vld [vmem:[%s1] sm:$0xff]
  %v29 = vld [vmem:[%s1 + $0x8] sm:$0xff]
  %v30 = vld [vmem:[%s1 + $0x10] sm:$0xff]
  %v31 = vld [vmem:[%s1 + $0x18] sm:$0xff]
  %v32 = vld [vmem:[%s1 + $0x20] sm:$0xff]
  %v33 = vld [vmem:[%s1 + $0x28] sm:$0xff]
  %v34 = vld [vmem:[%s1 + $0x30] sm:$0xff]
  %v35 = vld [vmem:[%s1 + $0x38] sm:$0xff]
  %v36 = vld [vmem:[%s1 + $0x40] sm:$0xff]
  %v37 = vld [vmem:[%s1 + $0x48] sm:$0xff]
  %v38 = vld [vmem:[%s1 + $0x50] sm:$0xff]
  %v39 = vld [vmem:[%s1 + $0x58] sm:$0xff]
  %v40 = vld [vmem:[%s1 + $0x60] sm:$0xff]
  %v41 = vld [vmem:[%s1 + $0x68] sm:$0xff]
  %v42 = vld [vmem:[%s1 + $0x70] sm:$0xff]
  %v43 = vld [vmem:[%s1 + $0x78] sm:$0xff]
  %v44 = vld [vmem:[%s2] sm:$0x1]
  %v46 = vlaneseq
  %v47 = vshrl.u32 %v46, 7
  %v48 = vsub.s32 0, %v47
  %v49 = vrot.slane %v44, %v48
  %51 = vmatprep.subr.mxu0 0.0
  %52 = vmatpush1.msra.mxu0 %v28
  %53 = vmatprep.subr.mxu0 0.0
  %54 = vmatpush1.msra.mxu0 %v29
  %55 = vmatprep.subr.mxu0 0.0
  %56 = vmatpush1.msra.mxu0 %v30
  %57 = vmatprep.subr.mxu0 0.0
  %58 = vmatpush1.msra.mxu0 %v31
  %59 = vmatprep.subr.mxu0 0.0
  %60 = vmatpush1.msra.mxu0 %v32
  %61 = vmatprep.subr.mxu0 0.0
  %62 = vmatpush1.msra.mxu0 %v33
  %63 = vmatprep.subr.mxu0 0.0
  %64 = vmatpush1.msra.mxu0 %v34
  %65 = vmatprep.subr.mxu0 0.0
  %66 = vmatpush1.msra.mxu0 %v35
  %67 = vmatprep.subr.mxu0 0.0
  %68 = vmatpush1.msra.mxu0 %v36
  %69 = vmatprep.subr.mxu0 0.0
  %70 = vmatpush1.msra.mxu0 %v37
  %71 = vmatprep.subr.mxu0 0.0
  %72 = vmatpush1.msra.mxu0 %v38
  %73 = vmatprep.subr.mxu0 0.0
  %74 = vmatpush1.msra.mxu0 %v39
  %75 = vmatprep.subr.mxu0 0.0
  %76 = vmatpush1.msra.mxu0 %v40
  %77 = vmatprep.subr.mxu0 0.0
  %78 = vmatpush1.msra.mxu0 %v41
  %79 = vmatprep.subr.mxu0 0.0
  %80 = vmatpush1.msra.mxu0 %v42
  %81 = vmatprep.subr.mxu0 0.0
  %82 = vmatpush1.msra.mxu0 %v43
  %83 = vmatprep.subr.mxu0 0.0
  %84 = vmatpush1.msra.mxu0 0.0
  %85 = vmatprep.subr.mxu0 0.0
  %86 = vmatpush1.msra.mxu0 0.0
  %87 = vmatprep.subr.mxu0 0.0
  %88 = vmatpush1.msra.mxu0 0.0
  %89 = vmatprep.subr.mxu0 0.0
  %90 = vmatpush1.msra.mxu0 0.0
  %91 = vmatprep.subr.mxu0 0.0
  %92 = vmatpush1.msra.mxu0 0.0
  %93 = vmatprep.subr.mxu0 0.0
  %94 = vmatpush1.msra.mxu0 0.0
  %95 = vmatprep.subr.mxu0 0.0
  %96 = vmatpush1.msra.mxu0 0.0
  %97 = vmatprep.subr.mxu0 0.0
  %98 = vmatpush1.msra.mxu0 0.0
  %99 = vmatprep.subr.mxu0 0.0
  %100 = vmatpush1.msra.mxu0 0.0
  %101 = vmatprep.subr.mxu0 0.0
  %102 = vmatpush1.msra.mxu0 0.0
  %103 = vmatprep.subr.mxu0 0.0
  %104 = vmatpush1.msra.mxu0 0.0
  %105 = vmatprep.subr.mxu0 0.0
  %106 = vmatpush1.msra.mxu0 0.0
  %107 = vmatprep.subr.mxu0 0.0
  %108 = vmatpush1.msra.mxu0 0.0
  %109 = vmatprep.subr.mxu0 0.0
  %110 = vmatpush1.msra.mxu0 0.0
  %111 = vmatprep.subr.mxu0 0.0
  %112 = vmatpush1.msra.mxu0 0.0
  %113 = vmatprep.subr.mxu0 0.0
  %114 = vmatpush1.msra.mxu0 0.0
  %115 = vmatprep.mubr.f32.mxu0 0.0
  %116 = vmatmul.mubr.f32.gmra.mrb[0].mxu0 %v26
  %v117 = vpop.f32.mrb[0].mxu0
  %v118 = vadd.f32 %v49, %v117
  %v119 = vpop.f32.mrb[0].mxu0
  %120 = vmatprep.mubr.f32.mxu0 0.0
  %121 = vmatmul.mubr.f32.gmra.mrb[0].mxu0 %v27
  %v122 = vpop.f32.mrb[0].mxu0
  %v123 = vadd.f32 %v49, %v122
  %v124 = vpop.f32.mrb[0].mxu0
  %125 = vdwg.mxu0
  %v126 = vmax.f32 %v118, 0.0
  %v127 = vmax.f32 %v123, 0.0
  %v128 = vld [vmem:[#allocation2] sm:$0xff]
  %v129 = vld [vmem:[#allocation2 + $0x8] sm:$0xff]
  %v130 = vld [vmem:[%s3] sm:$0xff]
  %v131 = vld [vmem:[%s3 + $0x8] sm:$0xff]
  %v132 = vld [vmem:[%s3 + $0x10] sm:$0xff]
  %v133 = vld [vmem:[%s3 + $0x18] sm:$0xff]
  %v134 = vld [vmem:[%s3 + $0x20] sm:$0xff]
  %v135 = vld [vmem:[%s3 + $0x28] sm:$0xff]
  %v136 = vld [vmem:[%s3 + $0x30] sm:$0xff]
  %v137 = vld [vmem:[%s3 + $0x38] sm:$0xff]
  %v138 = vld [vmem:[%s3 + $0x40] sm:$0xff]
  %v139 = vld [vmem:[%s3 + $0x48] sm:$0xff]
  %v140 = vld [vmem:[%s3 + $0x50] sm:$0xff]
  %v141 = vld [vmem:[%s3 + $0x58] sm:$0xff]
  %v142 = vld [vmem:[%s3 + $0x60] sm:$0xff]
  %v143 = vld [vmem:[%s3 + $0x68] sm:$0xff]
  %v144 = vld [vmem:[%s3 + $0x70] sm:$0xff]
  %v145 = vld [vmem:[%s3 + $0x78] sm:$0xff]
  %146 = vmatprep.subr.mxu0 0.0
  %147 = vmatpush1.msra.mxu0 %v130
  %148 = vmatprep.subr.mxu0 0.0
  %149 = vmatpush1.msra.mxu0 %v131
  %150 = vmatprep.subr.mxu0 0.0
  %151 = vmatpush1.msra.mxu0 %v132
  %152 = vmatprep.subr.mxu0 0.0
  %153 = vmatpush1.msra.mxu0 %v133
  %154 = vmatprep.subr.mxu0 0.0
  %155 = vmatpush1.msra.mxu0 %v134
  %156 = vmatprep.subr.mxu0 0.0
  %157 = vmatpush1.msra.mxu0 %v135
  %158 = vmatprep.subr.mxu0 0.0
  %159 = vmatpush1.msra.mxu0 %v136
  %160 = vmatprep.subr.mxu0 0.0
  %161 = vmatpush1.msra.mxu0 %v137
  %162 = vmatprep.subr.mxu0 0.0
  %163 = vmatpush1.msra.mxu0 %v138
  %164 = vmatprep.subr.mxu0 0.0
  %165 = vmatpush1.msra.mxu0 %v139
  %166 = vmatprep.subr.mxu0 0.0
  %167 = vmatpush1.msra.mxu0 %v140
  %168 = vmatprep.subr.mxu0 0.0
  %169 = vmatpush1.msra.mxu0 %v141
  %170 = vmatprep.subr.mxu0 0.0
  %171 = vmatpush1.msra.mxu0 %v142
  %172 = vmatprep.subr.mxu0 0.0
  %173 = vmatpush1.msra.mxu0 %v143
  %174 = vmatprep.subr.mxu0 0.0
  %175 = vmatpush1.msra.mxu0 %v144
  %176 = vmatprep.subr.mxu0 0.0
  %177 = vmatpush1.msra.mxu0 %v145
  %178 = vmatprep.subr.mxu0 0.0
  %179 = vmatpush1.msra.mxu0 0.0
  %180 = vmatprep.subr.mxu0 0.0
  %181 = vmatpush1.msra.mxu0 0.0
  %182 = vmatprep.subr.mxu0 0.0
  %183 = vmatpush1.msra.mxu0 0.0
  %184 = vmatprep.subr.mxu0 0.0
  %185 = vmatpush1.msra.mxu0 0.0
  %186 = vmatprep.subr.mxu0 0.0
  %187 = vmatpush1.msra.mxu0 0.0
  %188 = vmatprep.subr.mxu0 0.0
  %189 = vmatpush1.msra.mxu0 0.0
  %190 = vmatprep.subr.mxu0 0.0
  %191 = vmatpush1.msra.mxu0 0.0
  %192 = vmatprep.subr.mxu0 0.0
  %193 = vmatpush1.msra.mxu0 0.0
  %194 = vmatprep.subr.mxu0 0.0
  %195 = vmatpush1.msra.mxu0 0.0
  %196 = vmatprep.subr.mxu0 0.0
  %197 = vmatpush1.msra.mxu0 0.0
  %198 = vmatprep.subr.mxu0 0.0
  %199 = vmatpush1.msra.mxu0 0.0
  %200 = vmatprep.subr.mxu0 0.0
  %201 = vmatpush1.msra.mxu0 0.0
  %202 = vmatprep.subr.mxu0 0.0
  %203 = vmatpush1.msra.mxu0 0.0
  %204 = vmatprep.subr.mxu0 0.0
  %205 = vmatpush1.msra.mxu0 0.0
  %206 = vmatprep.subr.mxu0 0.0
  %207 = vmatpush1.msra.mxu0 0.0
  %208 = vmatprep.subr.mxu0 0.0
  %209 = vmatpush1.msra.mxu0 0.0
  %210 = vmatprep.mubr.f32.mxu0 0.0
  %211 = vmatmul.mubr.f32.gmra.mrb[0].mxu0 %v126
  %v212 = vpop.f32.mrb[0].mxu0
  %v213 = vadd.f32 0.0, %v212
  %v214 = vpop.f32.mrb[0].mxu0
  %215 = vmatprep.mubr.f32.mxu0 0.0
  %216 = vmatmul.mubr.f32.gmra.mrb[0].mxu0 %v127
  %v217 = vpop.f32.mrb[0].mxu0
  %v218 = vadd.f32 0.0, %v217
  %v219 = vpop.f32.mrb[0].mxu0
  %220 = vdwg.mxu0
  %v221 = vadd.f32 %v128, %v213
  %v222 = vadd.f32 %v129, %v218
  %223 = vst [vmem:[#allocation2] sm:$0xff] %v221
  %224 = vst [vmem:[#allocation2 + $0x8] sm:$0xff] %v222
  // Predicated region
  $region26: #{output_ffn.1} parent=0 // pred_check
    %p225 = pneg %p20
  $region27: #{output_ffn.1} parent=0 // pred_check_branch
    %227 = sbr.rel (%p225) target = $region29
  $region28: #{output_ffn.1} parent=0 // pred_region
    %v228 = vld [vmem:[#allocation2] sm:$0xff]
    %v229 = vld [vmem:[#allocation2 + $0x8] sm:$0xff]
    %v230 = vld [vmem:[%s4] sm:$0x1]
    %v232 = vlaneseq
    %v233 = vshrl.u32 %v232, 7
    %v234 = vsub.s32 0, %v233
    %v235 = vrot.slane %v230, %v234
    %v237 = vadd.f32 %v228, %v235
    %v238 = vadd.f32 %v229, %v235
    %239 = vst [vmem:[%s5] sm:$0xff] %v237
    %240 = vst [vmem:[%s5 + $0x8] sm:$0xff] %v238
  $region29: #{output_ffn.1} parent=0 // pred_fallthru
    _
  // Predicated region
  $region30: #{output_ffn.1} parent=0 // pred_check
    _
  $region31: #{output_ffn.1} parent=0 // pred_check_branch
    %242 = sbr.rel (0) target = $region33
  $region32: #{output_ffn.1} parent=0 // pred_region
    _
  $region33: #{output_ffn.1} parent=0 // pred_fallthru
    _
  // Predicated region
  $region34: #{output_ffn.1} parent=0 // pred_check
    _
  $region35: #{output_ffn.1} parent=0 // pred_check_branch
    %244 = sbr.rel (0) target = $region37
  $region36: #{output_ffn.1} parent=0 // pred_region
    _
  $region37: #{output_ffn.1} parent=0 // pred_fallthru
    _

</llo_original>
